<compile_context>
chip_gen: v7x
topology: tpu7x:2x2x1
jax: 0.10.0
libtpu: 0.0.40
codegen_flags: <defaults>
</compile_context>

<pallas_src>
import functools
import math

import jax
import jax.numpy as jnp
from jax.experimental import pallas as pl
from jax.experimental.pallas import tpu as pltpu

_LANES = 128
_SUBLANES = 8
_TILE_ROWS = 1024  # 512 KiB f32 block; past the ~512-row HBM roofline knee.


def _mask_l1_kernel(pred_ref, gt_ref, mask_ref, num_ref, den_ref, *,
                    tile_rows, steps_per_split, valid_rows, needs_mask):
    """Grid = (split, row_tile).  Axis 1 ("arbitrary") walks row tiles.

    num_ref / den_ref are (8,128) f32 output blocks whose block index depends
    only on the split axis, so they stay VMEM-resident across axis 1 and act as
    vector-shaped accumulators.
    """
    j = pl.program_id(1)

    @pl.when(j == 0)
    def _init():
        num_ref[...] = jnp.zeros_like(num_ref)
        den_ref[...] = jnp.zeros_like(den_ref)

    p = pred_ref[...].astype(jnp.float32)
    g = gt_ref[...].astype(jnp.float32)
    m = mask_ref[...].astype(jnp.float32)
    # TODO(synk): when pred/gt are bf16 and the VALU slot ever binds on
    # v6e/v7x, compute |p-g|*m in bf16 and only upcast the partial sums.

    num_c = jnp.abs(p - g) * m
    den_c = m

    if needs_mask:
        # Ragged last tile / dead step: rows at or beyond `valid_rows` hold
        # garbage (partial boundary DMA, or a clamped duplicate block on the
        # dead step of an odd split).  Use a select, not a multiply, so
        # garbage NaN/Inf cannot leak into the accumulators.
        s = pl.program_id(0)
        start_row = (s * steps_per_split + j) * tile_rows
        row_ids = start_row + jax.lax.broadcasted_iota(
            jnp.int32, (tile_rows, _LANES), 0)
        valid = row_ids < valid_rows
        num_c = jnp.where(valid, num_c, 0.0)
        den_c = jnp.where(valid, den_c, 0.0)

    # (tile_rows,128) -> (tile_rows/8, 8, 128): vreg-aligned untile; summing
    # over axis 0 is pure VALU adds producing one (8,128) partial.
    num_ref[...] += num_c.reshape(-1, _SUBLANES, _LANES).sum(axis=0)
    den_ref[...] += den_c.reshape(-1, _SUBLANES, _LANES).sum(axis=0)


def mask_l1_loss(pred, gt, mask, eps=1e-6):
    """Pallas TPU implementation of MaskL1Loss.forward.  Returns a scalar f32."""
    shape = jnp.broadcast_shapes(pred.shape, gt.shape, mask.shape)
    total = math.prod(shape) if shape else 1
    # Replication factor of mask under broadcast (PyTorch sums the ORIGINAL mask).
    rep = total // max(int(mask.size), 1)

    def _prep(x):
        if x.dtype == jnp.bool_:
            x = x.astype(jnp.int8)  # stream 1 byte/elem; cast to f32 in-kernel
        # TODO(synk): a broadcast mask is still materialized in HBM here; an
        # index_map that reuses the native-shape mask block per broadcast dim
        # would cut its HBM stream by `rep`x when tile boundaries align.
        return jnp.broadcast_to(x, shape).reshape(-1)

    pred_f, gt_f, mask_f = _prep(pred), _prep(gt), _prep(mask)

    # Sublane granule satisfying every streamed dtype's packing
    # (f32: 8, bf16/f16: 16, int8/bool: 32).
    granule = max(max(32 // x.dtype.itemsize, _SUBLANES)
                  for x in (pred_f, gt_f, mask_f))

    n = total
    rows = max(-(-n // _LANES), granule)
    n_padded = rows * _LANES
    if n_padded != n:
        # Only for lane-ragged totals (<128 elems) or sub-granule tiny inputs;
        # zero padding is exact (mask=0 contributes nothing to either sum).
        # TODO(synk): a wrapper-side reduction of the <128-element flat tail
        # would make lane-ragged sizes fully copy-free as well.
        pred_f = jnp.pad(pred_f, (0, n_padded - n))
        gt_f = jnp.pad(gt_f, (0, n_padded - n))
        mask_f = jnp.pad(mask_f, (0, n_padded - n))

    pred2 = pred_f.reshape(rows, _LANES)
    gt2 = gt_f.reshape(rows, _LANES)
    mask2 = mask_f.reshape(rows, _LANES)

    # Fixed tile size (no divisor search): floor to the granule so every block
    # start stays in bounds; the ragged last block is masked in-kernel.
    tile_rows = min(_TILE_ROWS, (rows // granule) * granule)
    steps_total = -(-rows // tile_rows)

    # Always split 2-way across the "parallel" axis when there is >1 tile so
    # both v7x TensorCores stream data; sequential (harmless) on 1-TC chips.
    n_splits = 2 if steps_total >= 2 else 1
    steps_per_split = -(-steps_total // n_splits)
    dead_steps = n_splits * steps_per_split != steps_total
    needs_mask = dead_steps or (steps_total * tile_rows != rows)

    if dead_steps:
        last_block = steps_total - 1

        def idx_map(s, j):
            # Clamp the dead step onto the last (in-bounds) block; its
            # contribution is zeroed by the in-kernel row mask.
            return (jnp.minimum(s * steps_per_split + j, last_block), 0)
    else:
        def idx_map(s, j):
            return (s * steps_per_split + j, 0)

    # TODO(synk): optionally try pipeline_mode=pl.Buffered(3) on the input
    # specs (few-% win on a pure streaming kernel) once validated on-device.
    in_spec = pl.BlockSpec((tile_rows, _LANES), idx_map)
    out_spec = pl.BlockSpec((_SUBLANES, _LANES), lambda s, j: (s, 0))

    in_bytes = n_padded * (pred2.dtype.itemsize + gt2.dtype.itemsize
                           + mask2.dtype.itemsize)
    cost = pl.CostEstimate(
        flops=5 * n_padded,
        transcendentals=0,
        bytes_accessed=in_bytes + 2 * n_splits * _SUBLANES * _LANES * 4,
    )

    kernel = functools.partial(
        _mask_l1_kernel,
        tile_rows=tile_rows,
        steps_per_split=steps_per_split,
        valid_rows=rows,
        needs_mask=needs_mask,
    )

    num_part, den_part = pl.pallas_call(
        kernel,
        out_shape=(
            jax.ShapeDtypeStruct((n_splits * _SUBLANES, _LANES), jnp.float32),
            jax.ShapeDtypeStruct((n_splits * _SUBLANES, _LANES), jnp.float32),
        ),
        grid_spec=pltpu.PrefetchScalarGridSpec(
            num_scalar_prefetch=0,
            grid=(n_splits, steps_per_split),
            in_specs=[in_spec, in_spec, in_spec],
            out_specs=[out_spec, out_spec],
        ),
        compiler_params=pltpu.CompilerParams(
            dimension_semantics=("parallel", "arbitrary"),
            # > v5e's 16 MiB default scoped limit, << v7x's 64 MiB physical.
            vmem_limit_bytes=32 * 1024 * 1024,
        ),
        cost_estimate=cost,
    )(pred2, gt2, mask2)

    num = num_part.sum()
    den = den_part.sum() / rep  # undo mask replication from broadcasting
    return num / (den + jnp.float32(eps))


def _reference(pred, gt, mask, eps=1e-6):
    pred = pred.astype(jnp.float32)
    gt = gt.astype(jnp.float32)
    mask = mask.astype(jnp.float32)
    return (jnp.abs(pred - gt) * mask).sum() / (mask.sum() + eps)


if __name__ == "__main__":
    key = jax.random.PRNGKey(0)
    k1, k2, k3, k4, k5, k6, k7, k8, k9 = jax.random.split(key, 9)

    # Case 1: f32, NCHW, all shapes equal (primary spec shape). Single exact tile.
    B, C, H, W = 2, 4, 16, 16
    pred = jax.random.uniform(k1, (B, C, H, W), dtype=jnp.float32)
    gt = jax.random.uniform(k2, (B, C, H, W), dtype=jnp.float32)
    mask = (jax.random.uniform(k3, (B, C, H, W)) > 0.5).astype(jnp.float32)
    loss = jax.block_until_ready(mask_l1_loss(pred, gt, mask))
    ref = _reference(pred, gt, mask)
    assert jnp.allclose(loss, ref, rtol=1e-5, atol=1e-6), (loss, ref)

    # Case 2: bf16 inputs, ragged size, bool mask streamed as int8, and a
    # broadcast (B,1,H,W) mask (exercises PyTorch's mask.sum() semantics).
    B2, C2, H2, W2 = 2, 4, 20, 20
    pred2 = jax.random.uniform(k4, (B2, C2, H2, W2), dtype=jnp.float32).astype(jnp.bfloat16)
    gt2 = jax.random.uniform(k5, (B2, C2, H2, W2), dtype=jnp.float32).astype(jnp.bfloat16)
    mask2 = jax.random.uniform(k6, (B2, 1, H2, W2)) > 0.5  # bool mask
    loss2 = jax.block_until_ready(mask_l1_loss(pred2, gt2, mask2))
    ref2 = _reference(pred2, gt2, mask2)
    assert jnp.allclose(loss2, ref2, rtol=1e-4, atol=1e-5), (loss2, ref2)

    # Case 3: larger ragged f32 case that exercises the cdiv grid, the
    # in-kernel tail mask, the 2-way split, and the clamped dead step
    # (steps_total = 3 is odd).
    B3, C3, H3, W3 = 2, 4, 181, 200
    pred3 = jax.random.uniform(k7, (B3, C3, H3, W3), dtype=jnp.float32)
    gt3 = jax.random.uniform(k8, (B3, C3, H3, W3), dtype=jnp.float32)
    mask3 = (jax.random.uniform(k9, (B3, C3, H3, W3)) > 0.5).astype(jnp.float32)
    loss3 = jax.block_until_ready(mask_l1_loss(pred3, gt3, mask3))
    ref3 = _reference(pred3, gt3, mask3)
    assert jnp.allclose(loss3, ref3, rtol=1e-4, atol=1e-5), (loss3, ref3)

    print("KERNEL_OK")
</pallas_src>

<mosaic_0001>
module attributes {stable_mosaic.version = 11 : i64} {
  func.func @_mask_l1_kernel(%arg0: i32, %arg1: i32, %arg2: memref<16x128xf32, #tpu.memory_space<vmem>>, %arg3: memref<16x128xf32, #tpu.memory_space<vmem>>, %arg4: memref<16x128xf32, #tpu.memory_space<vmem>>, %arg5: memref<8x128xf32, #tpu.memory_space<vmem>>, %arg6: memref<8x128xf32, #tpu.memory_space<vmem>>) attributes {dimension_semantics = [#tpu.dimension_semantics<parallel>, #tpu.dimension_semantics<arbitrary>], iteration_bounds = array<i64: 1, 1>, scalar_prefetch = 0 : i64, scratch_operands = 0 : i64, tpu.core_type = #tpu.core_type<tc>, window_params = [{transform_indices = @transform_0, window_bounds = array<i64: 16, 128>}, {transform_indices = @transform_1, window_bounds = array<i64: 16, 128>}, {transform_indices = @transform_2, window_bounds = array<i64: 16, 128>}, {transform_indices = @transform_3, window_bounds = array<i64: 8, 128>}, {transform_indices = @transform_4, window_bounds = array<i64: 8, 128>}]} {
    %c0_i32 = arith.constant 0 : i32
    %0 = arith.cmpi eq, %arg1, %c0_i32 : i32
    %1 = arith.extui %0 : i1 to i32
    %c0_i32_0 = arith.constant 0 : i32
    %2 = arith.cmpi ne, %1, %c0_i32_0 : i32
    scf.if %2 {
      %cst_15 = arith.constant 0.000000e+00 : f32
      %19 = vector.broadcast %cst_15 : f32 to vector<8x128xf32>
      %c0_16 = arith.constant 0 : index
      %c0_17 = arith.constant 0 : index
      %20 = vector.load %arg5[%c0_16, %c0_17] : memref<8x128xf32, #tpu.memory_space<vmem>>, vector<8x128xf32>
      tpu.vector_store %arg5[%c0_16, %c0_17], %19 {strides = array<i32>} : memref<8x128xf32, #tpu.memory_space<vmem>>, vector<8x128xf32>,
      %cst_18 = arith.constant 0.000000e+00 : f32
      %21 = vector.broadcast %cst_18 : f32 to vector<8x128xf32>
      %c0_19 = arith.constant 0 : index
      %c0_20 = arith.constant 0 : index
      %22 = vector.load %arg6[%c0_19, %c0_20] : memref<8x128xf32, #tpu.memory_space<vmem>>, vector<8x128xf32>
      tpu.vector_store %arg6[%c0_19, %c0_20], %21 {strides = array<i32>} : memref<8x128xf32, #tpu.memory_space<vmem>>, vector<8x128xf32>,
    } else {
    }
    %c0 = arith.constant 0 : index
    %c0_1 = arith.constant 0 : index
    %3 = vector.load %arg2[%c0, %c0_1] : memref<16x128xf32, #tpu.memory_space<vmem>>, vector<16x128xf32>
    %c0_2 = arith.constant 0 : index
    %c0_3 = arith.constant 0 : index
    %4 = vector.load %arg3[%c0_2, %c0_3] : memref<16x128xf32, #tpu.memory_space<vmem>>, vector<16x128xf32>
    %c0_4 = arith.constant 0 : index
    %c0_5 = arith.constant 0 : index
    %5 = vector.load %arg4[%c0_4, %c0_5] : memref<16x128xf32, #tpu.memory_space<vmem>>, vector<16x128xf32>
    %6 = arith.subf %3, %4 : vector<16x128xf32>
    %7 = math.absf %6 : vector<16x128xf32>
    %8 = arith.mulf %7, %5 : vector<16x128xf32>
    %c0_6 = arith.constant 0 : index
    %c0_7 = arith.constant 0 : index
    %9 = vector.load %arg5[%c0_6, %c0_7] : memref<8x128xf32, #tpu.memory_space<vmem>>, vector<8x128xf32>
    %10 = vector.shape_cast %8 : vector<16x128xf32> to vector<2x8x128xf32>
    %cst = arith.constant dense<0.000000e+00> : vector<8x128xf32>
    %11 = vector.multi_reduction <add>, %10, %cst [0] : vector<2x8x128xf32> to vector<8x128xf32>
    %12 = arith.addf %9, %11 : vector<8x128xf32>
    %c0_8 = arith.constant 0 : index
    %c0_9 = arith.constant 0 : index
    %13 = vector.load %arg5[%c0_8, %c0_9] : memref<8x128xf32, #tpu.memory_space<vmem>>, vector<8x128xf32>
    tpu.vector_store %arg5[%c0_8, %c0_9], %12 {strides = array<i32>} : memref<8x128xf32, #tpu.memory_space<vmem>>, vector<8x128xf32>,
    %c0_10 = arith.constant 0 : index
    %c0_11 = arith.constant 0 : index
    %14 = vector.load %arg6[%c0_10, %c0_11] : memref<8x128xf32, #tpu.memory_space<vmem>>, vector<8x128xf32>
    %15 = vector.shape_cast %5 : vector<16x128xf32> to vector<2x8x128xf32>
    %cst_12 = arith.constant dense<0.000000e+00> : vector<8x128xf32>
    %16 = vector.multi_reduction <add>, %15, %cst_12 [0] : vector<2x8x128xf32> to vector<8x128xf32>
    %17 = arith.addf %14, %16 : vector<8x128xf32>
    %c0_13 = arith.constant 0 : index
    %c0_14 = arith.constant 0 : index
    %18 = vector.load %arg6[%c0_13, %c0_14] : memref<8x128xf32, #tpu.memory_space<vmem>>, vector<8x128xf32>
    tpu.vector_store %arg6[%c0_13, %c0_14], %17 {strides = array<i32>} : memref<8x128xf32, #tpu.memory_space<vmem>>, vector<8x128xf32>,
    return
  }
  func.func @transform_0(%arg0: i32, %arg1: i32) -> (i32, i32) {
    %c1_i32 = arith.constant 1 : i32
    %0 = arith.muli %arg0, %c1_i32 : i32
    %1 = arith.addi %0, %arg1 : i32
    %c0_i32 = arith.constant 0 : i32
    %c0_i32_0 = arith.constant 0 : i32
    return %1, %c0_i32 : i32, i32
  }
  func.func @transform_1(%arg0: i32, %arg1: i32) -> (i32, i32) {
    %c1_i32 = arith.constant 1 : i32
    %0 = arith.muli %arg0, %c1_i32 : i32
    %1 = arith.addi %0, %arg1 : i32
    %c0_i32 = arith.constant 0 : i32
    %c0_i32_0 = arith.constant 0 : i32
    return %1, %c0_i32 : i32, i32
  }
  func.func @transform_2(%arg0: i32, %arg1: i32) -> (i32, i32) {
    %c1_i32 = arith.constant 1 : i32
    %0 = arith.muli %arg0, %c1_i32 : i32
    %1 = arith.addi %0, %arg1 : i32
    %c0_i32 = arith.constant 0 : i32
    %c0_i32_0 = arith.constant 0 : i32
    return %1, %c0_i32 : i32, i32
  }
  func.func @transform_3(%arg0: i32, %arg1: i32) -> (i32, i32) {
    %c0_i32 = arith.constant 0 : i32
    %c0_i32_0 = arith.constant 0 : i32
    return %arg0, %c0_i32 : i32, i32
  }
  func.func @transform_4(%arg0: i32, %arg1: i32) -> (i32, i32) {
    %c0_i32 = arith.constant 0 : i32
    %c0_i32_0 = arith.constant 0 : i32
    return %arg0, %c0_i32 : i32, i32
  }
}

</mosaic_0001>

<llo_original>
// kernel: tpu_custom_call.1
$region0: #{tpu_custom_call.1}
  #allocation0 [shape = 'u32[]', space=smem, size = 0x4, offset = 0x4, fixed_abs, tag = 'smem constant byte address 0x4 - core index']
  #allocation1 [shape = 'u32[144,128]{1,0:T(1,128)}', space=vmem, size = 0x12000, scoped, tag = 'internal scratch']
  %s0 = inlined_call_operand.hbm [shape: f32[16,128], index: 0, kind: input, shape index: {}]
  %s1 = inlined_call_operand.hbm [shape: f32[16,128], index: 1, kind: input, shape index: {}]
  %s2 = inlined_call_operand.hbm [shape: f32[16,128], index: 2, kind: input, shape index: {}]
  %s3 = inlined_call_operand.hbm [shape: f32[8,128], index: 3, kind: output, shape index: {0}]
  %s4 = inlined_call_operand.hbm [shape: f32[8,128], index: 4, kind: output, shape index: {1}]
  %5 = xla_tuple %s3, %s4
  %s6 = sld [smem:[#allocation0]]
  $region46: #{tpu_custom_call.1} parent=0
    _
  %s8 = ssub.s32 1, %s6
  %s9 = scalar_select 0, %s8, %s6
  $region1: #{tpu_custom_call.1} parent=0
    #allocation2 [shape = 'u8[8192]{0}', space=vmem, size = 0x2000, scoped, tag = 'input window, operand 0, single buffered']
    #allocation3 [shape = 's32[1]{0}', space=sflag, size = 0x4, scoped, tag = 'scoped memory for tpu_custom_call.1']
    #allocation4 [shape = 's32[1]{0}', space=sflag, size = 0x4, scoped, tag = 'scoped memory for tpu_custom_call.1']
    #allocation5 [shape = 'u8[8192]{0}', space=vmem, size = 0x2000, scoped, tag = 'input window, operand 1, single buffered']
    #allocation6 [shape = 's32[1]{0}', space=sflag, size = 0x4, scoped, tag = 'scoped memory for tpu_custom_call.1']
    #allocation7 [shape = 'u8[8192]{0}', space=vmem, size = 0x2000, scoped, tag = 'input window, operand 2, single buffered']
    #allocation8 [shape = 'u8[4096]{0}', space=vmem, size = 0x1000, scoped, tag = 'output window, operand 0, single buffered']
    #allocation9 [shape = 'u8[4096]{0}', space=vmem, size = 0x1000, scoped, tag = 'output window, operand 1, single buffered']
    #allocation10 [shape = 's32[1]{0}', space=sflag, size = 0x4, scoped, tag = 'scoped memory for tpu_custom_call.1']
    %10 = vsyncpa [#allocation3], 0
    %11 = vsyncpa [#allocation6], 0
    %12 = vsyncpa [#allocation4], 0
    %13 = vsyncpa [#allocation10], 0
    // Predicated region
    $region2: #{tpu_custom_call.1} parent=1 // pred_check
      _
    $region3: #{tpu_custom_call.1} parent=1 // pred_check_branch
      %15 = sbr.rel (0) target = $region5
    $region4: #{tpu_custom_call.1} parent=1 // pred_region
      %s16 = sadd.s32 0, 0
      %s17 = smul.u32 2, %s16
      %s19 = ssub.s32 256, 256
      %20 = vsyncadd [#allocation3], %s19
      %s21 = smul.addr %s17, 128
      %s22 = scalar_lea.hbm %s0, %s21
      %s23 = sshll.u32 [#allocation2], 4
      %s24 = int_to_ptr.vmem [resolvable:$true] %s23
      %29 = dma.hbm_to_vmem [thread:$0]  %s22, 256, %s24, [#allocation3], 128, 128, 8
    $region5: #{tpu_custom_call.1} parent=1 // pred_fallthru
      _
    // Predicated region
    $region6: #{tpu_custom_call.1} parent=1 // pred_check
      _
    $region7: #{tpu_custom_call.1} parent=1 // pred_check_branch
      %31 = sbr.rel (0) target = $region9
    $region8: #{tpu_custom_call.1} parent=1 // pred_region
      %s32 = sadd.s32 0, 0
      %s33 = smul.u32 2, %s32
      %s35 = ssub.s32 256, 256
      %36 = vsyncadd [#allocation6], %s35
      %s37 = smul.addr %s33, 128
      %s38 = scalar_lea.hbm %s1, %s37
      %s39 = sshll.u32 [#allocation5], 4
      %s40 = int_to_ptr.vmem [resolvable:$true] %s39
      %45 = dma.hbm_to_vmem [thread:$0]  %s38, 256, %s40, [#allocation6], 128, 128, 8
    $region9: #{tpu_custom_call.1} parent=1 // pred_fallthru
      _
    // Predicated region
    $region10: #{tpu_custom_call.1} parent=1 // pred_check
      _
    $region11: #{tpu_custom_call.1} parent=1 // pred_check_branch
      %47 = sbr.rel (0) target = $region13
    $region12: #{tpu_custom_call.1} parent=1 // pred_region
      %s48 = sadd.s32 0, 0
      %s49 = smul.u32 2, %s48
      %s51 = ssub.s32 256, 256
      %52 = vsyncadd [#allocation6], %s51
      %s53 = smul.addr %s49, 128
      %s54 = scalar_lea.hbm %s2, %s53
      %s55 = sshll.u32 [#allocation7], 4
      %s56 = int_to_ptr.vmem [resolvable:$true] %s55
      %61 = dma.hbm_to_vmem [thread:$0]  %s54, 256, %s56, [#allocation6], 128, 128, 8
    $region13: #{tpu_custom_call.1} parent=1 // pred_fallthru
      _
    // Predicated region
    $region14: #{tpu_custom_call.1} parent=1 // pred_check
      _
    $region15: #{tpu_custom_call.1} parent=1 // pred_check_branch
      %63 = sbr.rel (0) target = $region17
    $region16: #{tpu_custom_call.1} parent=1 // pred_region
      %64 = dma.done [#allocation3], 256
    $region17: #{tpu_custom_call.1} parent=1 // pred_fallthru
      _
    // Predicated region
    $region18: #{tpu_custom_call.1} parent=1 // pred_check
      _
    $region19: #{tpu_custom_call.1} parent=1 // pred_check_branch
      %66 = sbr.rel (0) target = $region21
    $region20: #{tpu_custom_call.1} parent=1 // pred_region
      %67 = dma.done [#allocation6], 256
    $region21: #{tpu_custom_call.1} parent=1 // pred_fallthru
      _
    // Predicated region
    $region22: #{tpu_custom_call.1} parent=1 // pred_check
      _
    $region23: #{tpu_custom_call.1} parent=1 // pred_check_branch
      %69 = sbr.rel (0) target = $region25
    $region24: #{tpu_custom_call.1} parent=1 // pred_region
      %70 = dma.done [#allocation6], 256
    $region25: #{tpu_custom_call.1} parent=1 // pred_fallthru
      _
    %s71 = sadd.s32 0, 0
    %s72 = smul.u32 2, %s71
    %s73 = sadd.s32 0, 0
    %s74 = smul.u32 2, %s73
    %s75 = sadd.s32 0, 0
    %s76 = smul.u32 2, %s75
    %p77 = scmp.eq.s32.totalorder 0, 0
    // Predicated region
    $region26: #{tpu_custom_call.1} parent=1 // pred_check
      %p78 = pneg %p77
    $region27: #{tpu_custom_call.1} parent=1 // pred_check_branch
      %80 = sbr.rel (%p78) target = $region29
    $region28: #{tpu_custom_call.1} parent=1 // pred_region
      %81 = vst [vmem:[#allocation8] sm:$0xff] 0.0
      %82 = vst [vmem:[#allocation9] sm:$0xff] 0.0
    $region29: #{tpu_custom_call.1} parent=1 // pred_fallthru
      _
    %v83 = vld [vmem:[#allocation2] sm:$0xff]
    %v84 = vld [vmem:[#allocation2 + $0x8] sm:$0xff]
    %v85 = vld [vmem:[#allocation5] sm:$0xff]
    %v86 = vld [vmem:[#allocation5 + $0x8] sm:$0xff]
    %v87 = vld [vmem:[#allocation7] sm:$0xff]
    %v88 = vld [vmem:[#allocation7 + $0x8] sm:$0xff]
    %v89 = vsub.f32 %v83, %v85
    %v90 = vsub.f32 %v84, %v86
    %v91 = vand.u32 2147483647, %v89
    %v92 = vand.u32 2147483647, %v90
    %v93 = vmul.f32 %v91, %v87
    %v94 = vmul.f32 %v92, %v88
    %v95 = vld [vmem:[#allocation8] sm:$0xff]
    %v96 = vadd.f32 %v93, %v94
    %v97 = vadd.f32 %v95, %v96
    %98 = vst [vmem:[#allocation8] sm:$0xff] %v97
    %v99 = vld [vmem:[#allocation9] sm:$0xff]
    %v100 = vadd.f32 %v87, %v88
    %v101 = vadd.f32 %v99, %v100
    %102 = vst [vmem:[#allocation9] sm:$0xff] %v101
    // Predicated region
    $region30: #{tpu_custom_call.1} parent=1 // pred_check
      _
    $region31: #{tpu_custom_call.1} parent=1 // pred_check_branch
      %104 = sbr.rel (0) target = $region33
    $region32: #{tpu_custom_call.1} parent=1 // pred_region
      %s106 = ssub.s32 128, 128
      %107 = vsyncadd [#allocation4], %s106
      %s109 = sshll.u32 [#allocation8], 4
      %s110 = int_to_ptr.vmem [resolvable:$true] %s109
      %112 = dma.vmem_to_hbm [thread:$0]  %s110, 128, %s3, [#allocation4]
    $region33: #{tpu_custom_call.1} parent=1 // pred_fallthru
      _
    // Predicated region
    $region34: #{tpu_custom_call.1} parent=1 // pred_check
      _
    $region35: #{tpu_custom_call.1} parent=1 // pred_check_branch
      %114 = sbr.rel (0) target = $region37
    $region36: #{tpu_custom_call.1} parent=1 // pred_region
      %s116 = ssub.s32 128, 128
      %117 = vsyncadd [#allocation10], %s116
      %s119 = sshll.u32 [#allocation9], 4
      %s120 = int_to_ptr.vmem [resolvable:$true] %s119
      %122 = dma.vmem_to_hbm [thread:$0]  %s120, 128, %s4, [#allocation10]
    $region37: #{tpu_custom_call.1} parent=1 // pred_fallthru
      _
    // Predicated region
    $region38: #{tpu_custom_call.1} parent=1 // pred_check
      _
    $region39: #{tpu_custom_call.1} parent=1 // pred_check_branch
      %124 = sbr.rel (0) target = $region41
    $region40: #{tpu_custom_call.1} parent=1 // pred_region
      %125 = dma.done [#allocation4], 128
    $region41: #{tpu_custom_call.1} parent=1 // pred_fallthru
      _
    // Predicated region
    $region42: #{tpu_custom_call.1} parent=1 // pred_check
      _
    $region43: #{tpu_custom_call.1} parent=1 // pred_check_branch
      %127 = sbr.rel (0) target = $region45
    $region44: #{tpu_custom_call.1} parent=1 // pred_region
      %128 = dma.done [#allocation10], 128
    $region45: #{tpu_custom_call.1} parent=1 // pred_fallthru
      _
    %129 = vsyncpa [#allocation3], 1
    %130 = vsyncpa [#allocation6], 1
    %131 = vsyncpa [#allocation4], 1
    %132 = vsyncpa [#allocation10], 1

</llo_original>
